<compile_context>
chip_gen: v7x
topology: tpu7x:2x2x1
jax: 0.10.0
libtpu: 0.0.40
codegen_flags: <defaults>
</compile_context>

<pallas_src>
import functools

import numpy as np

import jax
import jax.numpy as jnp
from jax import lax
from jax.experimental import pallas as pl
from jax.experimental.pallas import tpu as pltpu


def _pick_tile(n, target, align):
    """Largest tile <= target that divides n and is `align`-aligned (or the full axis)."""
    if n <= target:
        return n
    t = (target // align) * align
    while t >= align:
        if n % t == 0:
            return t
        t -= align
    # TODO(synk): no aligned divisor <= target exists; falling back to the full axis can
    # blow past VMEM for large awkwardly-factored N — pad N upstream in that case.
    return n


def _matmul_t(a, b):
    """a @ b.T with f32 accumulation: A[m, k] x B[n, k] -> [m, n] (MXU, trans_b form)."""
    return lax.dot_general(a, b, (((1,), (1,)), ((), ())),
                           preferred_element_type=jnp.float32)


def _stats_kernel(xq_ref, xs_ref, wq_ref, bq_ref, wkv_ref, bkv_ref, meanT_ref,
                  vmeanT_ref, kvs_ref, ksum_ref, vsum_ref, sq_ref, sk_ref, *, hc):
    """Pass 1: per source-row tile, accumulate global attention stats + transposed v_mean."""
    j = pl.program_id(0)

    @pl.when(j == 0)
    def _init():
        kvs_ref[...] = jnp.zeros_like(kvs_ref)
        ksum_ref[...] = jnp.zeros_like(ksum_ref)
        vsum_ref[...] = jnp.zeros_like(vsum_ref)
        sq_ref[...] = jnp.zeros_like(sq_ref)
        sk_ref[...] = jnp.zeros_like(sk_ref)

    # Q projection (query input) and fused K|V projection (source input).
    q = jnp.dot(xq_ref[...], wq_ref[...], preferred_element_type=jnp.float32) + bq_ref[...]
    kv = jnp.dot(xs_ref[...], wkv_ref[...], preferred_element_type=jnp.float32) + bkv_ref[...]
    k = kv[:, :hc]
    v = kv[:, hc:]

    # Head-averaged value rows, stored TRANSPOSED (lane-dense [C, tile]) for the GCN path:
    #   gcn_conv(value).mean(heads) == adj @ (value @ mean_mat)   (head mean is linear).
    vmeanT_ref[...] = _matmul_t(meanT_ref[...], v).astype(vmeanT_ref.dtype)

    # kvs = k^T v over all heads in one matmul (block-diag masked later, in the wrapper).
    kvs_ref[...] += lax.dot_general(k, v, (((0,), (0,)), ((), ())),
                                    preferred_element_type=jnp.float32)
    ksum_ref[...] += jnp.sum(k, axis=0, keepdims=True)
    vsum_ref[...] += jnp.sum(v, axis=0, keepdims=True)
    # Deferred global (Frobenius) L2 norms of q and k as scalar accumulators.
    sq_ref[...] += jnp.sum(jnp.sum(q * q, axis=1, keepdims=True), axis=0, keepdims=True)
    sk_ref[...] += jnp.sum(jnp.sum(k * k, axis=1, keepdims=True), axis=0, keepdims=True)


def _out_kernel(xq_ref, wq_ref, bq_ref, fused_ref, vsum_ref, meanT_ref,
                adjT_ref, vmeanT_ref, outT_ref, *, hc, n_total, approx_recip):
    """Pass 2: accumulate transposed GCN into the resident output; finalize attention at last j."""
    j = pl.program_id(1)

    @pl.when(j == 0)
    def _init():
        outT_ref[...] = jnp.zeros_like(outT_ref)

    # GCN partial sums accumulated directly into the resident (C, tm) output block.
    # Transposed, lane-dense form: full MXU output-lane utilization and unmasked stores.
    outT_ref[...] += jnp.dot(vmeanT_ref[...], adjT_ref[...],
                             preferred_element_type=jnp.float32)

    @pl.when(j == pl.num_programs(1) - 1)
    def _finalize():
        q = jnp.dot(xq_ref[...], wq_ref[...],
                    preferred_element_type=jnp.float32) + bq_ref[...]
        # fused = [scale*mask*kvs | scale*ksum-weighted-mask]: numerator and normalizer
        # of the linear attention in ONE wide matmul (scale/mask pre-folded in XLA).
        fo = jnp.dot(q, fused_ref[...], preferred_element_type=jnp.float32)
        attn_num = fo[:, :hc] + vsum_ref[...]
        norm = fo[:, hc:] + n_total
        if approx_recip:
            attn = attn_num * pl.reciprocal(norm, approx=True)   # EUP slot, ~free
        else:
            attn = attn_num / norm
        # Head mean produced already transposed: [C, HC] @ [tm, HC]^T -> [C, tm].
        outT_ref[...] += _matmul_t(meanT_ref[...], attn)


def transformer_conv(query_input, source_input, params, adj, num_heads, *,
                     row_tile=512, src_tile=2048, adj_dtype=jnp.bfloat16,
                     adj_is_transposed=False, approx_reciprocal=True):
    """Pallas TPU implementation of TransformerConv.forward (use_graph=True).

    adj: [N, N] normalized adjacency with adj[dst, src] (reference orientation), or the
    transposed adj_t[src, dst] if adj_is_transposed=True (preferred for large N: build it
    directly in adj_dtype to avoid an extra N^2 transpose/cast materialization).
    adj_dtype: dtype the adjacency (and v_mean) are streamed in; bf16 default; on v7x
    jnp.float8_e4m3fn is also valid (MXU-native fp8, no int path).  # TODO(synk): fp8 untested.
    """
    wq, bq, wk, bk, wv, bv = params
    N, C = query_input.shape
    H = num_heads
    HC = H * C
    f32 = jnp.float32

    # Fused K|V weight/bias (one matmul on the source input instead of two).
    wkv = jnp.concatenate([wk, wv], axis=1).astype(f32)
    bkv = jnp.concatenate([bk, bv], axis=1).astype(f32)
    wq_f = wq.astype(f32)
    bq_f = bq.astype(f32)
    xq = query_input.astype(f32)
    xs = source_input.astype(f32)

    # Static head-bookkeeping matrices (flattened head layout j = h*C + c).
    heads = np.arange(HC) // C
    head_mask = jnp.asarray((heads[:, None] == heads[None, :]).astype(np.float32))  # [HC,HC]
    meanT_np = (np.arange(C)[:, None] == (np.arange(HC)[None, :] % C)).astype(np.float32)
    meanT = jnp.asarray(meanT_np / float(H))                                        # [C, HC]

    # Adjacency streamed transposed (adj_t[src, dst]) and in a narrow MXU dtype.
    adj_t = adj.astype(adj_dtype) if adj_is_transposed else adj.T.astype(adj_dtype)

    # ---------------- pass 1: global stats over source-row tiles ----------------
    ts = _pick_tile(N, row_tile, 128)   # 128-aligned (or full): ts is a lane dim below
    vmeanT, kvs, ksum, vsum, sq, sk = pl.pallas_call(
        functools.partial(_stats_kernel, hc=HC),
        grid=(N // ts,),
        in_specs=[
            pl.BlockSpec((ts, C), lambda j: (j, 0)),        # xq tile
            pl.BlockSpec((ts, C), lambda j: (j, 0)),        # xs tile
            pl.BlockSpec((C, HC), lambda j: (0, 0)),        # Wq
            pl.BlockSpec((1, HC), lambda j: (0, 0)),        # bq
            pl.BlockSpec((C, 2 * HC), lambda j: (0, 0)),    # Wk|Wv fused
            pl.BlockSpec((1, 2 * HC), lambda j: (0, 0)),    # bk|bv fused
            pl.BlockSpec((C, HC), lambda j: (0, 0)),        # head-mean matrix (transposed)
        ],
        out_specs=[
            pl.BlockSpec((C, ts), lambda j: (0, j)),        # v_mean^T (lane-dense)
            pl.BlockSpec((HC, HC), lambda j: (0, 0)),       # kvs accumulator
            pl.BlockSpec((1, HC), lambda j: (0, 0)),        # k_sum
            pl.BlockSpec((1, HC), lambda j: (0, 0)),        # v_sum
            pl.BlockSpec((1, 1), lambda j: (0, 0)),         # sum(q^2)
            pl.BlockSpec((1, 1), lambda j: (0, 0)),         # sum(k^2)
        ],
        out_shape=[
            jax.ShapeDtypeStruct((C, N), adj_dtype),
            jax.ShapeDtypeStruct((HC, HC), f32),
            jax.ShapeDtypeStruct((1, HC), f32),
            jax.ShapeDtypeStruct((1, HC), f32),
            jax.ShapeDtypeStruct((1, 1), f32),
            jax.ShapeDtypeStruct((1, 1), f32),
        ],
        compiler_params=pltpu.CompilerParams(dimension_semantics=("arbitrary",)),
    )(xq, xs, wq_f, bq_f, wkv, bkv, meanT)

    # Pre-fold (plain XLA, tiny, once): the deferred global L2 scale 1/(||q||*||k||),
    # the block-diagonal head mask on kvs, and the ksum-weighted mask that produces the
    # attention normalizer — all into one [HC, 2HC] matrix consumed by pass 2.
    scale = lax.rsqrt(sq * sk)                                   # (1, 1)
    kvs_m = kvs * head_mask * scale                              # [HC, HC]
    norm_m = jnp.reshape(ksum, (HC, 1)) * head_mask * scale      # [HC, HC]
    fused = jnp.concatenate([kvs_m, norm_m], axis=1)             # [HC, 2HC]

    # ------------- pass 2: (dest tiles "parallel") x (source tiles "arbitrary") -------------
    tm = _pick_tile(N, row_tile, 128)   # dest axis (lane dim of adj_t / output blocks)
    tn = _pick_tile(N, src_tile, 128)   # source axis (lane dim of vmean_t blocks)
    # Default bf16 tiles: adj 512x2048x2B = 2 MiB per buffer, ~4.7 MiB total double-buffered
    # — fits the v5e 16 MiB / v7x 32 MiB scoped-VMEM defaults with room to spare.
    # If profiling on v7x still shows exposed adj DMA, add pipeline_mode=pl.Buffered(3)
    # to the adj_t BlockSpec below.
    outT = pl.pallas_call(
        functools.partial(_out_kernel, hc=HC, n_total=float(N),
                          approx_recip=approx_reciprocal),
        grid=(N // tm, N // tn),
        in_specs=[
            pl.BlockSpec((tm, C), lambda i, j: (i, 0)),       # xq tile
            pl.BlockSpec((C, HC), lambda i, j: (0, 0)),       # Wq
            pl.BlockSpec((1, HC), lambda i, j: (0, 0)),       # bq
            pl.BlockSpec((HC, 2 * HC), lambda i, j: (0, 0)),  # fused [kvs_m | norm_m]
            pl.BlockSpec((1, HC), lambda i, j: (0, 0)),       # v_sum
            pl.BlockSpec((C, HC), lambda i, j: (0, 0)),       # head-mean matrix (transposed)
            pl.BlockSpec((tn, tm), lambda i, j: (j, i)),      # adj_t tile (streamed, narrow dtype)
            pl.BlockSpec((C, tn), lambda i, j: (0, j)),       # v_mean^T tile (streamed, lane-dense)
        ],
        out_specs=pl.BlockSpec((C, tm), lambda i, j: (0, i)),  # resident accumulator over j
        out_shape=jax.ShapeDtypeStruct((C, N), f32),
        compiler_params=pltpu.CompilerParams(
            dimension_semantics=("parallel", "arbitrary")),    # megacore on the dest axis
    )(xq, wq_f, bq_f, fused, vsum, meanT, adj_t, vmeanT)

    # Tiny [C, N] -> [N, C] transpose in XLA; in-kernel stores stayed lane-dense.
    return outT.T


def build_gcn_adj(edge_index, N, *, dtype=jnp.float32, transposed=False):
    """Plain-JAX glue: sparse edge list -> dense symmetric-normalized adjacency.

    transposed=False: adj[dst, src] (reference gcn_conv orientation).
    transposed=True : adj_t[src, dst], ready to pass with adj_is_transposed=True.
    Build directly in the streaming dtype (e.g. bf16) to avoid a second N^2 array.
    """
    # TODO(synk): the scatter-add adjacency construction (and true sparse matmul) has no
    # clean Pallas TPU equivalent; kept in plain JAX — the GCN matmul itself is in-kernel.
    row, col = edge_index[0], edge_index[1]
    d = jnp.zeros((N,), jnp.float32).at[col].add(1.0)
    d_norm_in = jnp.sqrt(1.0 / d[col])
    d_norm_out = jnp.sqrt(1.0 / d[row])
    val = jnp.nan_to_num(d_norm_in * d_norm_out, nan=0.0, posinf=0.0, neginf=0.0)
    if transposed:
        adj = jnp.zeros((N, N), jnp.float32).at[row, col].add(val)
    else:
        adj = jnp.zeros((N, N), jnp.float32).at[col, row].add(val)
    return adj.astype(dtype)


def transformer_conv_ref(xq, xs, params, adj, H):
    """Pure-JAX reference mirroring the PyTorch forward exactly (adj in [dst, src] form)."""
    wq, bq, wk, bk, wv, bv = params
    N, C = xq.shape
    q = (xq @ wq + bq).reshape(N, H, C)
    k = (xs @ wk + bk).reshape(N, H, C)
    v = (xs @ wv + bv).reshape(N, H, C)
    q = q / jnp.linalg.norm(q)
    k = k / jnp.linalg.norm(k)
    kvs = jnp.einsum('lhm,lhd->hmd', k, v)
    num = jnp.einsum('nhm,hmd->nhd', q, kvs) + v.sum(0)[None]
    norm = jnp.einsum('nhm,hm->nh', q, k.sum(0))[:, :, None] + N
    attn = num / norm
    gcn = jnp.einsum('nl,lhd->nhd', adj, v)
    return (attn + gcn).mean(axis=1)


if __name__ == "__main__":
    C, H = 8, 4          # channels (= out_channels), num_heads
    HC = C * H

    def make_inputs(N, key):
        keys = jax.random.split(key, 8)
        xq = jax.random.normal(keys[0], (N, C), jnp.float32)
        xs = jax.random.normal(keys[1], (N, C), jnp.float32)
        # nn.Linear-style init: W ~ U(-1/sqrt(in), 1/sqrt(in)), stored as [in, out].
        scale = 1.0 / float(np.sqrt(C))
        wq = jax.random.uniform(keys[2], (C, HC), jnp.float32, -scale, scale)
        wk = jax.random.uniform(keys[3], (C, HC), jnp.float32, -scale, scale)
        wv = jax.random.uniform(keys[4], (C, HC), jnp.float32, -scale, scale)
        bq = jax.random.uniform(keys[5], (1, HC), jnp.float32, -scale, scale)
        bk = jax.random.uniform(keys[6], (1, HC), jnp.float32, -scale, scale)
        bv = jax.random.uniform(keys[7], (1, HC), jnp.float32, -scale, scale)
        params = (wq, bq, wk, bk, wv, bv)
        # Bidirectional ring graph as deterministic edge_index [2, 2N].
        src = jnp.arange(N, dtype=jnp.int32)
        dst = (src + 1) % N
        edge_index = jnp.stack([jnp.concatenate([src, dst]),
                                jnp.concatenate([dst, src])], axis=0)
        return xq, xs, params, edge_index

    key = jax.random.PRNGKey(0)

    # 1) tiny graph, single-tile grids, exact path (f32 adj stream + exact reciprocal).
    xq, xs, params, ei = make_inputs(16, key)
    adj = build_gcn_adj(ei, 16)
    out = jax.block_until_ready(
        transformer_conv(xq, xs, params, adj, H,
                         adj_dtype=jnp.float32, approx_reciprocal=False))
    ref = transformer_conv_ref(xq, xs, params, adj, H)
    np.testing.assert_allclose(np.asarray(out), np.asarray(ref), rtol=1e-3, atol=1e-3)

    # 2) larger graph, multi-tile grids (2 dest x 2 source tiles), default bf16 adj stream.
    xq, xs, params, ei = make_inputs(256, jax.random.fold_in(key, 1))
    adj = build_gcn_adj(ei, 256)
    out = jax.block_until_ready(
        transformer_conv(xq, xs, params, adj, H, row_tile=128, src_tile=128))
    ref = transformer_conv_ref(xq, xs, params, adj, H)
    np.testing.assert_allclose(np.asarray(out), np.asarray(ref), rtol=2e-2, atol=2e-2)

    # 3) same graph, adjacency built directly transposed & in the streaming dtype
    #    (no extra N^2 transpose/cast in the wrapper), default large tiles (full axis here).
    adj_t = build_gcn_adj(ei, 256, dtype=jnp.bfloat16, transposed=True)
    out_t = jax.block_until_ready(
        transformer_conv(xq, xs, params, adj_t, H, adj_is_transposed=True))
    np.testing.assert_allclose(np.asarray(out_t), np.asarray(ref), rtol=2e-2, atol=2e-2)

    print("KERNEL_OK")
</pallas_src>

<mosaic_0001>
module attributes {stable_mosaic.version = 11 : i64} {
  func.func @_stats_kernel(%arg0: i32, %arg1: memref<16x8xf32, #tpu.memory_space<vmem>>, %arg2: memref<16x8xf32, #tpu.memory_space<vmem>>, %arg3: memref<8x32xf32, #tpu.memory_space<vmem>>, %arg4: memref<1x32xf32, #tpu.memory_space<vmem>>, %arg5: memref<8x64xf32, #tpu.memory_space<vmem>>, %arg6: memref<1x64xf32, #tpu.memory_space<vmem>>, %arg7: memref<8x32xf32, #tpu.memory_space<vmem>>, %arg8: memref<8x16xf32, #tpu.memory_space<vmem>>, %arg9: memref<32x32xf32, #tpu.memory_space<vmem>>, %arg10: memref<1x32xf32, #tpu.memory_space<vmem>>, %arg11: memref<1x32xf32, #tpu.memory_space<vmem>>, %arg12: memref<1x1xf32, #tpu.memory_space<vmem>>, %arg13: memref<1x1xf32, #tpu.memory_space<vmem>>) attributes {dimension_semantics = [#tpu.dimension_semantics<arbitrary>], iteration_bounds = array<i64: 1>, scalar_prefetch = 0 : i64, scratch_operands = 0 : i64, tpu.core_type = #tpu.core_type<tc>, window_params = [{transform_indices = @transform_0, window_bounds = array<i64: 16, 8>}, {transform_indices = @transform_1, window_bounds = array<i64: 16, 8>}, {pipeline_mode = #tpu.pipeline_mode<synchronous>, transform_indices = @transform_2, window_bounds = array<i64: 8, 32>}, {pipeline_mode = #tpu.pipeline_mode<synchronous>, transform_indices = @transform_3, window_bounds = array<i64: 1, 32>}, {pipeline_mode = #tpu.pipeline_mode<synchronous>, transform_indices = @transform_4, window_bounds = array<i64: 8, 64>}, {pipeline_mode = #tpu.pipeline_mode<synchronous>, transform_indices = @transform_5, window_bounds = array<i64: 1, 64>}, {pipeline_mode = #tpu.pipeline_mode<synchronous>, transform_indices = @transform_6, window_bounds = array<i64: 8, 32>}, {transform_indices = @transform_7, window_bounds = array<i64: 8, 16>}, {pipeline_mode = #tpu.pipeline_mode<synchronous>, transform_indices = @transform_8, window_bounds = array<i64: 32, 32>}, {pipeline_mode = #tpu.pipeline_mode<synchronous>, transform_indices = @transform_9, window_bounds = array<i64: 1, 32>}, {pipeline_mode = #tpu.pipeline_mode<synchronous>, transform_indices = @transform_10, window_bounds = array<i64: 1, 32>}, {pipeline_mode = #tpu.pipeline_mode<synchronous>, transform_indices = @transform_11, window_bounds = array<i64: 1, 1>}, {pipeline_mode = #tpu.pipeline_mode<synchronous>, transform_indices = @transform_12, window_bounds = array<i64: 1, 1>}]} {
    %c0_i32 = arith.constant 0 : i32
    %0 = arith.cmpi eq, %arg0, %c0_i32 : i32
    %1 = arith.extui %0 : i1 to i32
    %c0_i32_0 = arith.constant 0 : i32
    %2 = arith.cmpi ne, %1, %c0_i32_0 : i32
    scf.if %2 {
      %cst_45 = arith.constant 0.000000e+00 : f32
      %50 = vector.broadcast %cst_45 : f32 to vector<32x32xf32>
      %c0_46 = arith.constant 0 : index
      %c0_47 = arith.constant 0 : index
      %51 = vector.load %arg9[%c0_46, %c0_47] : memref<32x32xf32, #tpu.memory_space<vmem>>, vector<32x32xf32>
      tpu.vector_store %arg9[%c0_46, %c0_47], %50 {strides = array<i32>} : memref<32x32xf32, #tpu.memory_space<vmem>>, vector<32x32xf32>,
      %cst_48 = arith.constant 0.000000e+00 : f32
      %52 = vector.broadcast %cst_48 : f32 to vector<1x32xf32>
      %c0_49 = arith.constant 0 : index
      %c0_50 = arith.constant 0 : index
      %53 = vector.load %arg10[%c0_49, %c0_50] : memref<1x32xf32, #tpu.memory_space<vmem>>, vector<1x32xf32>
      tpu.vector_store %arg10[%c0_49, %c0_50], %52 {strides = array<i32>} : memref<1x32xf32, #tpu.memory_space<vmem>>, vector<1x32xf32>,
      %cst_51 = arith.constant 0.000000e+00 : f32
      %54 = vector.broadcast %cst_51 : f32 to vector<1x32xf32>
      %c0_52 = arith.constant 0 : index
      %c0_53 = arith.constant 0 : index
      %55 = vector.load %arg11[%c0_52, %c0_53] : memref<1x32xf32, #tpu.memory_space<vmem>>, vector<1x32xf32>
      tpu.vector_store %arg11[%c0_52, %c0_53], %54 {strides = array<i32>} : memref<1x32xf32, #tpu.memory_space<vmem>>, vector<1x32xf32>,
      %cst_54 = arith.constant 0.000000e+00 : f32
      %56 = vector.broadcast %cst_54 : f32 to vector<1x1xf32>
      %c0_55 = arith.constant 0 : index
      %c0_56 = arith.constant 0 : index
      %57 = vector.load %arg12[%c0_55, %c0_56] : memref<1x1xf32, #tpu.memory_space<vmem>>, vector<1x1xf32>
      tpu.vector_store %arg12[%c0_55, %c0_56], %56 {strides = array<i32>} : memref<1x1xf32, #tpu.memory_space<vmem>>, vector<1x1xf32>,
      %cst_57 = arith.constant 0.000000e+00 : f32
      %58 = vector.broadcast %cst_57 : f32 to vector<1x1xf32>
      %c0_58 = arith.constant 0 : index
      %c0_59 = arith.constant 0 : index
      %59 = vector.load %arg13[%c0_58, %c0_59] : memref<1x1xf32, #tpu.memory_space<vmem>>, vector<1x1xf32>
      tpu.vector_store %arg13[%c0_58, %c0_59], %58 {strides = array<i32>} : memref<1x1xf32, #tpu.memory_space<vmem>>, vector<1x1xf32>,
    } else {
    }
    %c0 = arith.constant 0 : index
    %c0_1 = arith.constant 0 : index
    %3 = vector.load %arg1[%c0, %c0_1] : memref<16x8xf32, #tpu.memory_space<vmem>>, vector<16x8xf32>
    %c0_2 = arith.constant 0 : index
    %c0_3 = arith.constant 0 : index
    %4 = vector.load %arg3[%c0_2, %c0_3] : memref<8x32xf32, #tpu.memory_space<vmem>>, vector<8x32xf32>
    %cst = arith.constant dense<0.000000e+00> : vector<16x32xf32>
    %5 = tpu.matmul %3, %4, %cst {dimension_numbers = #tpu.dot_dimension_numbers<[1], [0], [0], [1], [0, 0, 1, 1], [], []>} : vector<16x8xf32>, vector<8x32xf32>, vector<16x32xf32> -> vector<16x32xf32>
    %c0_4 = arith.constant 0 : index
    %c0_5 = arith.constant 0 : index
    %6 = vector.load %arg4[%c0_4, %c0_5] : memref<1x32xf32, #tpu.memory_space<vmem>>, vector<1x32xf32>
    %7 = vector.broadcast %6 : vector<1x32xf32> to vector<16x32xf32>
    %8 = arith.addf %5, %7 : vector<16x32xf32>
    %c0_6 = arith.constant 0 : index
    %c0_7 = arith.constant 0 : index
    %9 = vector.load %arg2[%c0_6, %c0_7] : memref<16x8xf32, #tpu.memory_space<vmem>>, vector<16x8xf32>
    %c0_8 = arith.constant 0 : index
    %c0_9 = arith.constant 0 : index
    %10 = vector.load %arg5[%c0_8, %c0_9] : memref<8x64xf32, #tpu.memory_space<vmem>>, vector<8x64xf32>
    %cst_10 = arith.constant dense<0.000000e+00> : vector<16x64xf32>
    %11 = tpu.matmul %9, %10, %cst_10 {dimension_numbers = #tpu.dot_dimension_numbers<[1], [0], [0], [1], [0, 0, 1, 1], [], []>} : vector<16x8xf32>, vector<8x64xf32>, vector<16x64xf32> -> vector<16x64xf32>
    %c0_11 = arith.constant 0 : index
    %c0_12 = arith.constant 0 : index
    %12 = vector.load %arg6[%c0_11, %c0_12] : memref<1x64xf32, #tpu.memory_space<vmem>>, vector<1x64xf32>
    %13 = vector.broadcast %12 : vector<1x64xf32> to vector<16x64xf32>
    %14 = arith.addf %11, %13 : vector<16x64xf32>
    %15 = vector.extract_strided_slice %14 {offsets = [0, 0], sizes = [16, 32], strides = [1, 1]} : vector<16x64xf32> to vector<16x32xf32>
    %16 = vector.extract_strided_slice %14 {offsets = [0, 32], sizes = [16, 32], strides = [1, 1]} : vector<16x64xf32> to vector<16x32xf32>
    %c0_13 = arith.constant 0 : index
    %c0_14 = arith.constant 0 : index
    %17 = vector.load %arg7[%c0_13, %c0_14] : memref<8x32xf32, #tpu.memory_space<vmem>>, vector<8x32xf32>
    %cst_15 = arith.constant dense<0.000000e+00> : vector<8x16xf32>
    %18 = tpu.matmul %17, %16, %cst_15 {dimension_numbers = #tpu.dot_dimension_numbers<[1], [1], [0], [0], [0, 0, 1, 0], [], []>} : vector<8x32xf32>, vector<16x32xf32>, vector<8x16xf32> -> vector<8x16xf32>
    %c0_16 = arith.constant 0 : index
    %c0_17 = arith.constant 0 : index
    %19 = vector.load %arg8[%c0_16, %c0_17] : memref<8x16xf32, #tpu.memory_space<vmem>>, vector<8x16xf32>
    tpu.vector_store %arg8[%c0_16, %c0_17], %18 {strides = array<i32>} : memref<8x16xf32, #tpu.memory_space<vmem>>, vector<8x16xf32>,
    %c0_18 = arith.constant 0 : index
    %c0_19 = arith.constant 0 : index
    %20 = vector.load %arg9[%c0_18, %c0_19] : memref<32x32xf32, #tpu.memory_space<vmem>>, vector<32x32xf32>
    %cst_20 = arith.constant dense<0.000000e+00> : vector<32x32xf32>
    %21 = tpu.matmul %15, %16, %cst_20 {dimension_numbers = #tpu.dot_dimension_numbers<[0], [0], [1], [1], [0, 1, 1, 1], [], []>} : vector<16x32xf32>, vector<16x32xf32>, vector<32x32xf32> -> vector<32x32xf32>
    %22 = arith.addf %20, %21 : vector<32x32xf32>
    %c0_21 = arith.constant 0 : index
    %c0_22 = arith.constant 0 : index
    %23 = vector.load %arg9[%c0_21, %c0_22] : memref<32x32xf32, #tpu.memory_space<vmem>>, vector<32x32xf32>
    tpu.vector_store %arg9[%c0_21, %c0_22], %22 {strides = array<i32>} : memref<32x32xf32, #tpu.memory_space<vmem>>, vector<32x32xf32>,
    %c0_23 = arith.constant 0 : index
    %c0_24 = arith.constant 0 : index
    %24 = vector.load %arg10[%c0_23, %c0_24] : memref<1x32xf32, #tpu.memory_space<vmem>>, vector<1x32xf32>
    %cst_25 = arith.constant dense<0.000000e+00> : vector<32xf32>
    %25 = vector.multi_reduction <add>, %15, %cst_25 [0] : vector<16x32xf32> to vector<32xf32>
    %26 = vector.shape_cast %25 : vector<32xf32> to vector<1x32xf32>
    %27 = arith.addf %24, %26 : vector<1x32xf32>
    %c0_26 = arith.constant 0 : index
    %c0_27 = arith.constant 0 : index
    %28 = vector.load %arg10[%c0_26, %c0_27] : memref<1x32xf32, #tpu.memory_space<vmem>>, vector<1x32xf32>
    tpu.vector_store %arg10[%c0_26, %c0_27], %27 {strides = array<i32>} : memref<1x32xf32, #tpu.memory_space<vmem>>, vector<1x32xf32>,
    %c0_28 = arith.constant 0 : index
    %c0_29 = arith.constant 0 : index
    %29 = vector.load %arg11[%c0_28, %c0_29] : memref<1x32xf32, #tpu.memory_space<vmem>>, vector<1x32xf32>
    %cst_30 = arith.constant dense<0.000000e+00> : vector<32xf32>
    %30 = vector.multi_reduction <add>, %16, %cst_30 [0] : vector<16x32xf32> to vector<32xf32>
    %31 = vector.shape_cast %30 : vector<32xf32> to vector<1x32xf32>
    %32 = arith.addf %29, %31 : vector<1x32xf32>
    %c0_31 = arith.constant 0 : index
    %c0_32 = arith.constant 0 : index
    %33 = vector.load %arg11[%c0_31, %c0_32] : memref<1x32xf32, #tpu.memory_space<vmem>>, vector<1x32xf32>
    tpu.vector_store %arg11[%c0_31, %c0_32], %32 {strides = array<i32>} : memref<1x32xf32, #tpu.memory_space<vmem>>, vector<1x32xf32>,
    %c0_33 = arith.constant 0 : index
    %c0_34 = arith.constant 0 : index
    %34 = vector.load %arg12[%c0_33, %c0_34] : memref<1x1xf32, #tpu.memory_space<vmem>>, vector<1x1xf32>
    %35 = arith.mulf %8, %8 : vector<16x32xf32>
    %cst_35 = arith.constant dense<0.000000e+00> : vector<16xf32>
    %36 = vector.multi_reduction <add>, %35, %cst_35 [1] : vector<16x32xf32> to vector<16xf32>
    %37 = vector.shape_cast %36 : vector<16xf32> to vector<16x1xf32>
    %cst_36 = arith.constant dense<0.000000e+00> : vector<1xf32>
    %38 = vector.multi_reduction <add>, %37, %cst_36 [0] : vector<16x1xf32> to vector<1xf32>
    %39 = vector.shape_cast %38 : vector<1xf32> to vector<1x1xf32>
    %40 = arith.addf %34, %39 : vector<1x1xf32>
    %c0_37 = arith.constant 0 : index
    %c0_38 = arith.constant 0 : index
    %41 = vector.load %arg12[%c0_37, %c0_38] : memref<1x1xf32, #tpu.memory_space<vmem>>, vector<1x1xf32>
    tpu.vector_store %arg12[%c0_37, %c0_38], %40 {strides = array<i32>} : memref<1x1xf32, #tpu.memory_space<vmem>>, vector<1x1xf32>,
    %c0_39 = arith.constant 0 : index
    %c0_40 = arith.constant 0 : index
    %42 = vector.load %arg13[%c0_39, %c0_40] : memref<1x1xf32, #tpu.memory_space<vmem>>, vector<1x1xf32>
    %43 = arith.mulf %15, %15 : vector<16x32xf32>
    %cst_41 = arith.constant dense<0.000000e+00> : vector<16xf32>
    %44 = vector.multi_reduction <add>, %43, %cst_41 [1] : vector<16x32xf32> to vector<16xf32>
    %45 = vector.shape_cast %44 : vector<16xf32> to vector<16x1xf32>
    %cst_42 = arith.constant dense<0.000000e+00> : vector<1xf32>
    %46 = vector.multi_reduction <add>, %45, %cst_42 [0] : vector<16x1xf32> to vector<1xf32>
    %47 = vector.shape_cast %46 : vector<1xf32> to vector<1x1xf32>
    %48 = arith.addf %42, %47 : vector<1x1xf32>
    %c0_43 = arith.constant 0 : index
    %c0_44 = arith.constant 0 : index
    %49 = vector.load %arg13[%c0_43, %c0_44] : memref<1x1xf32, #tpu.memory_space<vmem>>, vector<1x1xf32>
    tpu.vector_store %arg13[%c0_43, %c0_44], %48 {strides = array<i32>} : memref<1x1xf32, #tpu.memory_space<vmem>>, vector<1x1xf32>,
    return
  }
  func.func @transform_0(%arg0: i32) -> (i32, i32) {
    %c0_i32 = arith.constant 0 : i32
    %c0_i32_0 = arith.constant 0 : i32
    return %arg0, %c0_i32 : i32, i32
  }
  func.func @transform_1(%arg0: i32) -> (i32, i32) {
    %c0_i32 = arith.constant 0 : i32
    %c0_i32_0 = arith.constant 0 : i32
    return %arg0, %c0_i32 : i32, i32
  }
  func.func @transform_2(%arg0: i32) -> (i32, i32) {
    %c0_i32 = arith.constant 0 : i32
    %c0_i32_0 = arith.constant 0 : i32
    %c0_i32_1 = arith.constant 0 : i32
    return %c0_i32, %c0_i32_0 : i32, i32
  }
  func.func @transform_3(%arg0: i32) -> (i32, i32) {
    %c0_i32 = arith.constant 0 : i32
    %c0_i32_0 = arith.constant 0 : i32
    %c0_i32_1 = arith.constant 0 : i32
    return %c0_i32, %c0_i32_0 : i32, i32
  }
  func.func @transform_4(%arg0: i32) -> (i32, i32) {
    %c0_i32 = arith.constant 0 : i32
    %c0_i32_0 = arith.constant 0 : i32
    %c0_i32_1 = arith.constant 0 : i32
    return %c0_i32, %c0_i32_0 : i32, i32
  }
  func.func @transform_5(%arg0: i32) -> (i32, i32) {
    %c0_i32 = arith.constant 0 : i32
    %c0_i32_0 = arith.constant 0 : i32
    %c0_i32_1 = arith.constant 0 : i32
    return %c0_i32, %c0_i32_0 : i32, i32
  }
  func.func @transform_6(%arg0: i32) -> (i32, i32) {
    %c0_i32 = arith.constant 0 : i32
    %c0_i32_0 = arith.constant 0 : i32
    %c0_i32_1 = arith.constant 0 : i32
    return %c0_i32, %c0_i32_0 : i32, i32
  }
  func.func @transform_7(%arg0: i32) -> (i32, i32) {
    %c0_i32 = arith.constant 0 : i32
    %c0_i32_0 = arith.constant 0 : i32
    return %c0_i32, %arg0 : i32, i32
  }
  func.func @transform_8(%arg0: i32) -> (i32, i32) {
    %c0_i32 = arith.constant 0 : i32
    %c0_i32_0 = arith.constant 0 : i32
    %c0_i32_1 = arith.constant 0 : i32
    return %c0_i32, %c0_i32_0 : i32, i32
  }
  func.func @transform_9(%arg0: i32) -> (i32, i32) {
    %c0_i32 = arith.constant 0 : i32
    %c0_i32_0 = arith.constant 0 : i32
    %c0_i32_1 = arith.constant 0 : i32
    return %c0_i32, %c0_i32_0 : i32, i32
  }
  func.func @transform_10(%arg0: i32) -> (i32, i32) {
    %c0_i32 = arith.constant 0 : i32
    %c0_i32_0 = arith.constant 0 : i32
    %c0_i32_1 = arith.constant 0 : i32
    return %c0_i32, %c0_i32_0 : i32, i32
  }
  func.func @transform_11(%arg0: i32) -> (i32, i32) {
    %c0_i32 = arith.constant 0 : i32
    %c0_i32_0 = arith.constant 0 : i32
    %c0_i32_1 = arith.constant 0 : i32
    return %c0_i32, %c0_i32_0 : i32, i32
  }
  func.func @transform_12(%arg0: i32) -> (i32, i32) {
    %c0_i32 = arith.constant 0 : i32
    %c0_i32_0 = arith.constant 0 : i32
    %c0_i32_1 = arith.constant 0 : i32
    return %c0_i32, %c0_i32_0 : i32, i32
  }
}

</mosaic_0001>

<llo_original>
// kernel: tpu_custom_call.1
$region0: #{tpu_custom_call.1}
  #allocation0 [shape = 'u32[]', space=smem, size = 0x4, offset = 0x4, fixed_abs, tag = 'smem constant byte address 0x4 - core index']
  #allocation1 [shape = 'u32[144,128]{1,0:T(1,128)}', space=vmem, size = 0x12000, scoped, tag = 'internal scratch']
  %s0 = inlined_call_operand.vmem [shape: f32[16,8], index: 0, kind: input, shape index: {}]
  %s1 = inlined_call_operand.vmem [shape: f32[16,8], index: 1, kind: input, shape index: {}]
  %s2 = inlined_call_operand.vmem [shape: f32[8,32], index: 2, kind: input, shape index: {}]
  %s3 = inlined_call_operand.vmem [shape: f32[1,32], index: 3, kind: input, shape index: {}]
  %s4 = inlined_call_operand.vmem [shape: f32[8,64], index: 4, kind: input, shape index: {}]
  %s5 = inlined_call_operand.vmem [shape: f32[1,64], index: 5, kind: input, shape index: {}]
  %s6 = inlined_call_operand.vmem [shape: f32[8,32], index: 6, kind: input, shape index: {}]
  %s7 = inlined_call_operand.hbm [shape: f32[8,16], index: 7, kind: output, shape index: {0}]
  %s8 = inlined_call_operand.hbm [shape: f32[32,32], index: 8, kind: output, shape index: {1}]
  %s9 = inlined_call_operand.hbm [shape: f32[1,32], index: 9, kind: output, shape index: {2}]
  %s10 = inlined_call_operand.hbm [shape: f32[1,32], index: 10, kind: output, shape index: {3}]
  %s11 = inlined_call_operand.hbm [shape: f32[1,1], index: 11, kind: output, shape index: {4}]
  %s12 = inlined_call_operand.hbm [shape: f32[1,1], index: 12, kind: output, shape index: {5}]
  %13 = xla_tuple %s7, %s8, %s9, %s10, %s11, %s12
  %s14 = sld [smem:[#allocation0]]
  $region82: #{tpu_custom_call.1} parent=0
    _
  %s16 = ssub.s32 1, %s14
  %s17 = scalar_select 0, %s16, %s14
  $region1: #{tpu_custom_call.1} parent=0
    #allocation2 [shape = 'u8[4096]{0}', space=vmem, size = 0x1000, scoped, tag = 'output window, operand 0, single buffered']
    #allocation3 [shape = 's32[1]{0}', space=sflag, size = 0x4, scoped, tag = 'scoped memory for tpu_custom_call.1']
    #allocation4 [shape = 'u8[16384]{0}', space=vmem, size = 0x4000, scoped, tag = 'output window, operand 1, single buffered']
    #allocation5 [shape = 's32[1]{0}', space=sflag, size = 0x4, scoped, tag = 'scoped memory for tpu_custom_call.1']
    #allocation6 [shape = 'u8[512]{0}', space=vmem, size = 0x400, scoped, tag = 'output window, operand 2, single buffered']
    #allocation7 [shape = 'u8[512]{0}', space=vmem, size = 0x400, scoped, tag = 'output window, operand 3, single buffered']
    #allocation8 [shape = 's32[1]{0}', space=sflag, size = 0x4, scoped, tag = 'scoped memory for tpu_custom_call.1']
    #allocation9 [shape = 'u8[512]{0}', space=vmem, size = 0x400, scoped, tag = 'output window, operand 4, single buffered']
    #allocation10 [shape = 'u8[512]{0}', space=vmem, size = 0x400, scoped, tag = 'output window, operand 5, single buffered']
    #allocation11 [shape = 's32[1]{0}', space=sflag, size = 0x4, scoped, tag = 'scoped memory for tpu_custom_call.1']
    %18 = vsyncpa [#allocation3], 0
    %19 = vsyncpa [#allocation5], 0
    %20 = vsyncpa [#allocation8], 0
    %21 = vsyncpa [#allocation11], 0
    // Predicated region
    $region2: #{tpu_custom_call.1} parent=1 // pred_check
      _
    $region3: #{tpu_custom_call.1} parent=1 // pred_check_branch
      %23 = sbr.rel (0) target = $region5
    $region4: #{tpu_custom_call.1} parent=1 // pred_region
      _
    $region5: #{tpu_custom_call.1} parent=1 // pred_fallthru
      _
    // Predicated region
    $region6: #{tpu_custom_call.1} parent=1 // pred_check
      _
    $region7: #{tpu_custom_call.1} parent=1 // pred_check_branch
      %25 = sbr.rel (0) target = $region9
    $region8: #{tpu_custom_call.1} parent=1 // pred_region
      _
    $region9: #{tpu_custom_call.1} parent=1 // pred_fallthru
      _
    // Predicated region
    $region10: #{tpu_custom_call.1} parent=1 // pred_check
      _
    $region11: #{tpu_custom_call.1} parent=1 // pred_check_branch
      %27 = sbr.rel (0) target = $region13
    $region12: #{tpu_custom_call.1} parent=1 // pred_region
      _
    $region13: #{tpu_custom_call.1} parent=1 // pred_fallthru
      _
    // Predicated region
    $region14: #{tpu_custom_call.1} parent=1 // pred_check
      _
    $region15: #{tpu_custom_call.1} parent=1 // pred_check_branch
      %29 = sbr.rel (0) target = $region17
    $region16: #{tpu_custom_call.1} parent=1 // pred_region
      _
    $region17: #{tpu_custom_call.1} parent=1 // pred_fallthru
      _
    // Predicated region
    $region18: #{tpu_custom_call.1} parent=1 // pred_check
      _
    $region19: #{tpu_custom_call.1} parent=1 // pred_check_branch
      %31 = sbr.rel (0) target = $region21
    $region20: #{tpu_custom_call.1} parent=1 // pred_region
      _
    $region21: #{tpu_custom_call.1} parent=1 // pred_fallthru
      _
    // Predicated region
    $region22: #{tpu_custom_call.1} parent=1 // pred_check
      _
    $region23: #{tpu_custom_call.1} parent=1 // pred_check_branch
      %33 = sbr.rel (0) target = $region25
    $region24: #{tpu_custom_call.1} parent=1 // pred_region
      _
    $region25: #{tpu_custom_call.1} parent=1 // pred_fallthru
      _
    // Predicated region
    $region26: #{tpu_custom_call.1} parent=1 // pred_check
      _
    $region27: #{tpu_custom_call.1} parent=1 // pred_check_branch
      %35 = sbr.rel (0) target = $region29
    $region28: #{tpu_custom_call.1} parent=1 // pred_region
      _
    $region29: #{tpu_custom_call.1} parent=1 // pred_fallthru
      _
    %p36 = scmp.eq.s32.totalorder 0, 0
    // Predicated region
    $region30: #{tpu_custom_call.1} parent=1 // pred_check
      %p37 = pneg %p36
    $region31: #{tpu_custom_call.1} parent=1 // pred_check_branch
      %39 = sbr.rel (%p37) target = $region33
    $region32: #{tpu_custom_call.1} parent=1 // pred_region
      %vm40 = vcmask 261120
      %41 = vst.msk [vmem:[#allocation4] sm:$0xff] %vm40, 0.0
      %42 = vst.msk [vmem:[#allocation4 + $0x8] sm:$0xff] %vm40, 0.0
      %43 = vst.msk [vmem:[#allocation4 + $0x10] sm:$0xff] %vm40, 0.0
      %44 = vst.msk [vmem:[#allocation4 + $0x18] sm:$0xff] %vm40, 0.0
      %vm45 = vcmask 253952
      %46 = vst.msk [vmem:[#allocation6] sm:$0x1] %vm45, 0.0
      %47 = vst.msk [vmem:[#allocation7] sm:$0x1] %vm45, 0.0
      %vm48 = vcmask 0
      %49 = vst.msk [vmem:[#allocation9] sm:$0x1] %vm48, 0.0
      %50 = vst.msk [vmem:[#allocation10] sm:$0x1] %vm48, 0.0
    $region33: #{tpu_custom_call.1} parent=1 // pred_fallthru
      _
    %v51 = vld [vmem:[%s0] sm:$0xff]
    %v52 = vld [vmem:[%s0 + $0x8] sm:$0xff]
    %v53 = vld [vmem:[%s2] sm:$0xff]
    %v54 = vld [vmem:[%s3] sm:$0x1]
    %v56 = vlaneseq
    %v57 = vshrl.u32 %v56, 7
    %v58 = vsub.s32 0, %v57
    %v59 = vrot.slane %v54, %v58
    %vm61 = vcmask 64512
    %v63 = vsel %vm61, %v51, 0
    %v66 = vsel %vm61, %v52, 0
    %68 = vmatprep.subr.mxu0 0.0
    %69 = vmatpush1.msra.mxu0 %v53
    %70 = vmatprep.subr.mxu0 0.0
    %71 = vmatpush1.msra.mxu0 0.0
    %72 = vmatprep.subr.mxu0 0.0
    %73 = vmatpush1.msra.mxu0 0.0
    %74 = vmatprep.subr.mxu0 0.0
    %75 = vmatpush1.msra.mxu0 0.0
    %76 = vmatprep.subr.mxu0 0.0
    %77 = vmatpush1.msra.mxu0 0.0
    %78 = vmatprep.subr.mxu0 0.0
    %79 = vmatpush1.msra.mxu0 0.0
    %80 = vmatprep.subr.mxu0 0.0
    %81 = vmatpush1.msra.mxu0 0.0
    %82 = vmatprep.subr.mxu0 0.0
    %83 = vmatpush1.msra.mxu0 0.0
    %84 = vmatprep.subr.mxu0 0.0
    %85 = vmatpush1.msra.mxu0 0.0
    %86 = vmatprep.subr.mxu0 0.0
    %87 = vmatpush1.msra.mxu0 0.0
    %88 = vmatprep.subr.mxu0 0.0
    %89 = vmatpush1.msra.mxu0 0.0
    %90 = vmatprep.subr.mxu0 0.0
    %91 = vmatpush1.msra.mxu0 0.0
    %92 = vmatprep.subr.mxu0 0.0
    %93 = vmatpush1.msra.mxu0 0.0
    %94 = vmatprep.subr.mxu0 0.0
    %95 = vmatpush1.msra.mxu0 0.0
    %96 = vmatprep.subr.mxu0 0.0
    %97 = vmatpush1.msra.mxu0 0.0
    %98 = vmatprep.subr.mxu0 0.0
    %99 = vmatpush1.msra.mxu0 0.0
    %100 = vmatprep.subr.mxu0 0.0
    %101 = vmatpush1.msra.mxu0 0.0
    %102 = vmatprep.subr.mxu0 0.0
    %103 = vmatpush1.msra.mxu0 0.0
    %104 = vmatprep.subr.mxu0 0.0
    %105 = vmatpush1.msra.mxu0 0.0
    %106 = vmatprep.subr.mxu0 0.0
    %107 = vmatpush1.msra.mxu0 0.0
    %108 = vmatprep.subr.mxu0 0.0
    %109 = vmatpush1.msra.mxu0 0.0
    %110 = vmatprep.subr.mxu0 0.0
    %111 = vmatpush1.msra.mxu0 0.0
    %112 = vmatprep.subr.mxu0 0.0
    %113 = vmatpush1.msra.mxu0 0.0
    %114 = vmatprep.subr.mxu0 0.0
    %115 = vmatpush1.msra.mxu0 0.0
    %116 = vmatprep.subr.mxu0 0.0
    %117 = vmatpush1.msra.mxu0 0.0
    %118 = vmatprep.subr.mxu0 0.0
    %119 = vmatpush1.msra.mxu0 0.0
    %120 = vmatprep.subr.mxu0 0.0
    %121 = vmatpush1.msra.mxu0 0.0
    %122 = vmatprep.subr.mxu0 0.0
    %123 = vmatpush1.msra.mxu0 0.0
    %124 = vmatprep.subr.mxu0 0.0
    %125 = vmatpush1.msra.mxu0 0.0
    %126 = vmatprep.subr.mxu0 0.0
    %127 = vmatpush1.msra.mxu0 0.0
    %128 = vmatprep.subr.mxu0 0.0
    %129 = vmatpush1.msra.mxu0 0.0
    %130 = vmatprep.subr.mxu0 0.0
    %131 = vmatpush1.msra.mxu0 0.0
    %132 = vmatprep.mubr.f32.mxu0 0.0
    %133 = vmatmul.mubr.f32.gmra.mrb[0].mxu0 %v63
    %v134 = vpop.f32.mrb[0].mxu0
    %v135 = vadd.f32 %v59, %v134
    %v136 = vpop.f32.mrb[0].mxu0
    %137 = vmatprep.mubr.f32.mxu0 0.0
    %138 = vmatmul.mubr.f32.gmra.mrb[0].mxu0 %v66
    %v139 = vpop.f32.mrb[0].mxu0
    %v140 = vadd.f32 %v59, %v139
    %v141 = vpop.f32.mrb[0].mxu0
    %142 = vdwg.mxu0
    %v143 = vld [vmem:[%s1] sm:$0xff]
    %v144 = vld [vmem:[%s1 + $0x8] sm:$0xff]
    %v145 = vld [vmem:[%s4] sm:$0xff]
    %v146 = vld [vmem:[%s5] sm:$0x1]
    %v148 = vlaneseq
    %v149 = vshrl.u32 %v148, 7
    %v150 = vsub.s32 0, %v149
    %v151 = vrot.slane %v146, %v150
    %v154 = vsel %vm61, %v143, 0
    %v157 = vsel %vm61, %v144, 0
    %159 = vmatprep.subr.mxu0 0.0
    %160 = vmatpush1.msra.mxu0 %v145
    %161 = vmatprep.subr.mxu0 0.0
    %162 = vmatpush1.msra.mxu0 0.0
    %163 = vmatprep.subr.mxu0 0.0
    %164 = vmatpush1.msra.mxu0 0.0
    %165 = vmatprep.subr.mxu0 0.0
    %166 = vmatpush1.msra.mxu0 0.0
    %167 = vmatprep.subr.mxu0 0.0
    %168 = vmatpush1.msra.mxu0 0.0
    %169 = vmatprep.subr.mxu0 0.0
    %170 = vmatpush1.msra.mxu0 0.0
    %171 = vmatprep.subr.mxu0 0.0
    %172 = vmatpush1.msra.mxu0 0.0
    %173 = vmatprep.subr.mxu0 0.0
    %174 = vmatpush1.msra.mxu0 0.0
    %175 = vmatprep.subr.mxu0 0.0
    %176 = vmatpush1.msra.mxu0 0.0
    %177 = vmatprep.subr.mxu0 0.0
    %178 = vmatpush1.msra.mxu0 0.0
    %179 = vmatprep.subr.mxu0 0.0
    %180 = vmatpush1.msra.mxu0 0.0
    %181 = vmatprep.subr.mxu0 0.0
    %182 = vmatpush1.msra.mxu0 0.0
    %183 = vmatprep.subr.mxu0 0.0
    %184 = vmatpush1.msra.mxu0 0.0
    %185 = vmatprep.subr.mxu0 0.0
    %186 = vmatpush1.msra.mxu0 0.0
    %187 = vmatprep.subr.mxu0 0.0
    %188 = vmatpush1.msra.mxu0 0.0
    %189 = vmatprep.subr.mxu0 0.0
    %190 = vmatpush1.msra.mxu0 0.0
    %191 = vmatprep.subr.mxu0 0.0
    %192 = vmatpush1.msra.mxu0 0.0
    %193 = vmatprep.subr.mxu0 0.0
    %194 = vmatpush1.msra.mxu0 0.0
    %195 = vmatprep.subr.mxu0 0.0
    %196 = vmatpush1.msra.mxu0 0.0
    %197 = vmatprep.subr.mxu0 0.0
    %198 = vmatpush1.msra.mxu0 0.0
    %199 = vmatprep.subr.mxu0 0.0
    %200 = vmatpush1.msra.mxu0 0.0
    %201 = vmatprep.subr.mxu0 0.0
    %202 = vmatpush1.msra.mxu0 0.0
    %203 = vmatprep.subr.mxu0 0.0
    %204 = vmatpush1.msra.mxu0 0.0
    %205 = vmatprep.subr.mxu0 0.0
    %206 = vmatpush1.msra.mxu0 0.0
    %207 = vmatprep.subr.mxu0 0.0
    %208 = vmatpush1.msra.mxu0 0.0
    %209 = vmatprep.subr.mxu0 0.0
    %210 = vmatpush1.msra.mxu0 0.0
    %211 = vmatprep.subr.mxu0 0.0
    %212 = vmatpush1.msra.mxu0 0.0
    %213 = vmatprep.subr.mxu0 0.0
    %214 = vmatpush1.msra.mxu0 0.0
    %215 = vmatprep.subr.mxu0 0.0
    %216 = vmatpush1.msra.mxu0 0.0
    %217 = vmatprep.subr.mxu0 0.0
    %218 = vmatpush1.msra.mxu0 0.0
    %219 = vmatprep.subr.mxu0 0.0
    %220 = vmatpush1.msra.mxu0 0.0
    %221 = vmatprep.subr.mxu0 0.0
    %222 = vmatpush1.msra.mxu0 0.0
    %223 = vmatprep.mubr.f32.mxu0 0.0
    %224 = vmatmul.mubr.f32.gmra.mrb[0].mxu0 %v154
    %v225 = vpop.f32.mrb[0].mxu0
    %v226 = vadd.f32 %v151, %v225
    %v227 = vpop.f32.mrb[0].mxu0
    %228 = vmatprep.mubr.f32.mxu0 0.0
    %229 = vmatmul.mubr.f32.gmra.mrb[0].mxu0 %v157
    %v230 = vpop.f32.mrb[0].mxu0
    %v231 = vadd.f32 %v151, %v230
    %v232 = vpop.f32.mrb[0].mxu0
    %233 = vdwg.mxu0
    %v234 = vld [vmem:[%s6] sm:$0xff]
    %237 = vrot.lane.b32.xlu0 %v226, 96
    %v238 = vpop.permute.xlu0 %237
    %239 = vrot.lane.b32.xlu0 %v231, 96
    %v240 = vpop.permute.xlu0 %239
    %vm241 = vcmask 261120
    %v243 = vsel %vm241, %v234, 0
    %v245 = vsel %vm241, %v238, 0
    %v247 = vsel %vm241, %v240, 0
    %249 = vmatprep.subr.mxu0 0.0
    %250 = vmatpush1.xpose.msra.mxu0 %v245
    %251 = vmatprep.subr.mxu0 0.0
    %252 = vmatpush1.xpose.msra.mxu0 %v247
    %253 = vmatprep.subr.mxu0 0.0
    %254 = vmatpush1.xpose.msra.mxu0 0.0
    %255 = vmatprep.subr.mxu0 0.0
    %256 = vmatpush1.xpose.msra.mxu0 0.0
    %257 = vmatprep.subr.mxu0 0.0
    %258 = vmatpush1.xpose.msra.mxu0 0.0
    %259 = vmatprep.subr.mxu0 0.0
    %260 = vmatpush1.xpose.msra.mxu0 0.0
    %261 = vmatprep.subr.mxu0 0.0
    %262 = vmatpush1.xpose.msra.mxu0 0.0
    %263 = vmatprep.subr.mxu0 0.0
    %264 = vmatpush1.xpose.msra.mxu0 0.0
    %265 = vmatprep.subr.mxu0 0.0
    %266 = vmatpush1.xpose.msra.mxu0 0.0
    %267 = vmatprep.subr.mxu0 0.0
    %268 = vmatpush1.xpose.msra.mxu0 0.0
    %269 = vmatprep.subr.mxu0 0.0
    %270 = vmatpush1.xpose.msra.mxu0 0.0
    %271 = vmatprep.subr.mxu0 0.0
    %272 = vmatpush1.xpose.msra.mxu0 0.0
    %273 = vmatprep.subr.mxu0 0.0
    %274 = vmatpush1.xpose.msra.mxu0 0.0
    %275 = vmatprep.subr.mxu0 0.0
    %276 = vmatpush1.xpose.msra.mxu0 0.0
    %277 = vmatprep.subr.mxu0 0.0
    %278 = vmatpush1.xpose.msra.mxu0 0.0
    %279 = vmatprep.subr.mxu0 0.0
    %280 = vmatpush1.xpose.msra.mxu0 0.0
    %281 = vmatprep.subr.mxu0 0.0
    %282 = vmatpush1.xpose.msra.mxu0 0.0
    %283 = vmatprep.subr.mxu0 0.0
    %284 = vmatpush1.xpose.msra.mxu0 0.0
    %285 = vmatprep.subr.mxu0 0.0
    %286 = vmatpush1.xpose.msra.mxu0 0.0
    %287 = vmatprep.subr.mxu0 0.0
    %288 = vmatpush1.xpose.msra.mxu0 0.0
    %289 = vmatprep.subr.mxu0 0.0
    %290 = vmatpush1.xpose.msra.mxu0 0.0
    %291 = vmatprep.subr.mxu0 0.0
    %292 = vmatpush1.xpose.msra.mxu0 0.0
    %293 = vmatprep.subr.mxu0 0.0
    %294 = vmatpush1.xpose.msra.mxu0 0.0
    %295 = vmatprep.subr.mxu0 0.0
    %296 = vmatpush1.xpose.msra.mxu0 0.0
    %297 = vmatprep.subr.mxu0 0.0
    %298 = vmatpush1.xpose.msra.mxu0 0.0
    %299 = vmatprep.subr.mxu0 0.0
    %300 = vmatpush1.xpose.msra.mxu0 0.0
    %301 = vmatprep.subr.mxu0 0.0
    %302 = vmatpush1.xpose.msra.mxu0 0.0
    %303 = vmatprep.subr.mxu0 0.0
    %304 = vmatpush1.xpose.msra.mxu0 0.0
    %305 = vmatprep.subr.mxu0 0.0
    %306 = vmatpush1.xpose.msra.mxu0 0.0
    %307 = vmatprep.subr.mxu0 0.0
    %308 = vmatpush1.xpose.msra.mxu0 0.0
    %309 = vmatprep.subr.mxu0 0.0
    %310 = vmatpush1.xpose.msra.mxu0 0.0
    %311 = vmatprep.subr.mxu0 0.0
    %312 = vmatpush1.xpose.msra.mxu0 0.0
    %313 = vmatprep.mubr.f32.mxu0 0.0
    %314 = vmatmul.mubr.f32.gmra.mrb[0].mxu0 %v243
    %v315 = vpop.f32.mrb[0].mxu0
    %v316 = vadd.f32 0.0, %v315
    %v317 = vpop.f32.mrb[0].mxu0
    %318 = vdwg.mxu0
    %vm319 = vcmask 130048
    %320 = vst.msk [vmem:[#allocation2] sm:$0xff] %vm319, %v316
    %v321 = vld [vmem:[#allocation4] sm:$0xff]
    %v322 = vld [vmem:[#allocation4 + $0x8] sm:$0xff]
    %v323 = vld [vmem:[#allocation4 + $0x10] sm:$0xff]
    %v324 = vld [vmem:[#allocation4 + $0x18] sm:$0xff]
    %325 = vxpose.xlu0.b32.start [1/16] %v226, 128
    %326 = vxpose.xlu0.b32.cont [2/16] %v231, 128
    %327 = vxpose.xlu0.b32.cont [3/16] 0.0, 128
    %328 = vxpose.xlu0.b32.cont [4/16] 0.0, 128
    %329 = vxpose.xlu0.b32.cont [5/16] 0.0, 128
    %330 = vxpose.xlu0.b32.cont [6/16] 0.0, 128
    %331 = vxpose.xlu0.b32.cont [7/16] 0.0, 128
    %332 = vxpose.xlu0.b32.cont [8/16] 0.0, 128
    %333 = vxpose.xlu0.b32.cont [9/16] 0.0, 128
    %334 = vxpose.xlu0.b32.cont [10/16] 0.0, 128
    %335 = vxpose.xlu0.b32.cont [11/16] 0.0, 128
    %336 = vxpose.xlu0.b32.cont [12/16] 0.0, 128
    %337 = vxpose.xlu0.b32.cont [13/16] 0.0, 128
    %338 = vxpose.xlu0.b32.cont [14/16] 0.0, 128
    %339 = vxpose.xlu0.b32.cont [15/16] 0.0, 128
    %340 = vxpose.xlu0.b32.end [16/16] 0.0, 128
    %v341 = vpop.trf.xlu0
    %v342 = vpop.trf.xlu0
    %v343 = vpop.trf.xlu0
    %v344 = vpop.trf.xlu0
    %v345 = vpop.trf.xlu0
    %v346 = vpop.trf.xlu0
    %v347 = vpop.trf.xlu0
    %v348 = vpop.trf.xlu0
    %v349 = vpop.trf.xlu0
    %v350 = vpop.trf.xlu0
    %v351 = vpop.trf.xlu0
    %v352 = vpop.trf.xlu0
    %v353 = vpop.trf.xlu0
    %v354 = vpop.trf.xlu0
    %v355 = vpop.trf.xlu0
    %v356 = vpop.trf.xlu0
    %v360 = vsel %vm319, %v341, 0
    %v363 = vsel %vm319, %v342, 0
    %v366 = vsel %vm319, %v343, 0
    %v369 = vsel %vm319, %v344, 0
    %371 = vmatprep.subr.mxu0 0.0
    %372 = vmatpush1.msra.mxu0 %v238
    %373 = vmatprep.subr.mxu0 0.0
    %374 = vmatpush1.msra.mxu0 %v240
    %375 = vmatprep.subr.mxu0 0.0
    %376 = vmatpush1.msra.mxu0 0.0
    %377 = vmatprep.subr.mxu0 0.0
    %378 = vmatpush1.msra.mxu0 0.0
    %379 = vmatprep.subr.mxu0 0.0
    %380 = vmatpush1.msra.mxu0 0.0
    %381 = vmatprep.subr.mxu0 0.0
    %382 = vmatpush1.msra.mxu0 0.0
    %383 = vmatprep.subr.mxu0 0.0
    %384 = vmatpush1.msra.mxu0 0.0
    %385 = vmatprep.subr.mxu0 0.0
    %386 = vmatpush1.msra.mxu0 0.0
    %387 = vmatprep.subr.mxu0 0.0
    %388 = vmatpush1.msra.mxu0 0.0
    %389 = vmatprep.subr.mxu0 0.0
    %390 = vmatpush1.msra.mxu0 0.0
    %391 = vmatprep.subr.mxu0 0.0
    %392 = vmatpush1.msra.mxu0 0.0
    %393 = vmatprep.subr.mxu0 0.0
    %394 = vmatpush1.msra.mxu0 0.0
    %395 = vmatprep.subr.mxu0 0.0
    %396 = vmatpush1.msra.mxu0 0.0
    %397 = vmatprep.subr.mxu0 0.0
    %398 = vmatpush1.msra.mxu0 0.0
    %399 = vmatprep.subr.mxu0 0.0
    %400 = vmatpush1.msra.mxu0 0.0
    %401 = vmatprep.subr.mxu0 0.0
    %402 = vmatpush1.msra.mxu0 0.0
    %403 = vmatprep.subr.mxu0 0.0
    %404 = vmatpush1.msra.mxu0 0.0
    %405 = vmatprep.subr.mxu0 0.0
    %406 = vmatpush1.msra.mxu0 0.0
    %407 = vmatprep.subr.mxu0 0.0
    %408 = vmatpush1.msra.mxu0 0.0
    %409 = vmatprep.subr.mxu0 0.0
    %410 = vmatpush1.msra.mxu0 0.0
    %411 = vmatprep.subr.mxu0 0.0
    %412 = vmatpush1.msra.mxu0 0.0
    %413 = vmatprep.subr.mxu0 0.0
    %414 = vmatpush1.msra.mxu0 0.0
    %415 = vmatprep.subr.mxu0 0.0
    %416 = vmatpush1.msra.mxu0 0.0
    %417 = vmatprep.subr.mxu0 0.0
    %418 = vmatpush1.msra.mxu0 0.0
    %419 = vmatprep.subr.mxu0 0.0
    %420 = vmatpush1.msra.mxu0 0.0
    %421 = vmatprep.subr.mxu0 0.0
    %422 = vmatpush1.msra.mxu0 0.0
    %423 = vmatprep.subr.mxu0 0.0
    %424 = vmatpush1.msra.mxu0 0.0
    %425 = vmatprep.subr.mxu0 0.0
    %426 = vmatpush1.msra.mxu0 0.0
    %427 = vmatprep.subr.mxu0 0.0
    %428 = vmatpush1.msra.mxu0 0.0
    %429 = vmatprep.subr.mxu0 0.0
    %430 = vmatpush1.msra.mxu0 0.0
    %431 = vmatprep.subr.mxu0 0.0
    %432 = vmatpush1.msra.mxu0 0.0
    %433 = vmatprep.subr.mxu0 0.0
    %434 = vmatpush1.msra.mxu0 0.0
    %435 = vmatprep.mubr.f32.mxu0 0.0
    %436 = vmatmul.mubr.f32.gmra.mrb[0].mxu0 %v360
    %v437 = vpop.f32.mrb[0].mxu0
    %v438 = vadd.f32 0.0, %v437
    %v439 = vpop.f32.mrb[0].mxu0
    %440 = vmatprep.mubr.f32.mxu0 0.0
    %441 = vmatmul.mubr.f32.gmra.mrb[0].mxu0 %v363
    %v442 = vpop.f32.mrb[0].mxu0
    %v443 = vadd.f32 0.0, %v442
    %v444 = vpop.f32.mrb[0].mxu0
    %445 = vmatprep.mubr.f32.mxu0 0.0
    %446 = vmatmul.mubr.f32.gmra.mrb[0].mxu0 %v366
    %v447 = vpop.f32.mrb[0].mxu0
    %v448 = vadd.f32 0.0, %v447
    %v449 = vpop.f32.mrb[0].mxu0
    %450 = vmatprep.mubr.f32.mxu0 0.0
    %451 = vmatmul.mubr.f32.gmra.mrb[0].mxu0 %v369
    %v452 = vpop.f32.mrb[0].mxu0
    %v453 = vadd.f32 0.0, %v452
    %v454 = vpop.f32.mrb[0].mxu0
    %455 = vdwg.mxu0
    %v456 = vadd.f32 %v321, %v438
    %v457 = vadd.f32 %v322, %v443
    %v458 = vadd.f32 %v323, %v448
    %v459 = vadd.f32 %v324, %v453
    %460 = vst.msk [vmem:[#allocation4] sm:$0xff] %vm241, %v456
    %461 = vst.msk [vmem:[#allocation4 + $0x8] sm:$0xff] %vm241, %v457
    %462 = vst.msk [vmem:[#allocation4 + $0x10] sm:$0xff] %vm241, %v458
    %463 = vst.msk [vmem:[#allocation4 + $0x18] sm:$0xff] %vm241, %v459
    %v464 = vld [vmem:[#allocation6] sm:$0x1]
    %v465 = vsel %vm241, %v226, 0.0
    %v466 = vsel %vm241, %v231, 0.0
    %v467 = vadd.f32 %v465, %v466
    %v468 = vrot.slane %v467, 4
    %v469 = vadd.f32 %v467, %v468
    %v470 = vrot.slane %v469, 2
    %v471 = vadd.f32 %v469, %v470
    %v472 = vrot.slane %v471, 1
    %v473 = vadd.f32 %v471, %v472
    %v474 = vadd.f32 %v464, %v473
    %vm475 = vcmask 253952
    %476 = vst.msk [vmem:[#allocation6] sm:$0x1] %vm475, %v474
    %v477 = vld [vmem:[#allocation7] sm:$0x1]
    %vm478 = vcmask 523520
    %v479 = vsel %vm478, %v226, 0.0
    %v480 = vsel %vm478, %v231, 0.0
    %v481 = vadd.f32 %v479, %v480
    %v482 = vrot.slane %v481, 4
    %v483 = vadd.f32 %v481, %v482
    %v484 = vrot.slane %v483, 2
    %v485 = vadd.f32 %v483, %v484
    %v486 = vrot.slane %v485, 1
    %v487 = vadd.f32 %v485, %v486
    %v490 = vunpack.c.l.s4 1966171168
    %v491 = vunpack.c.0.s8 %v490
    %v492 = vlaneseq
    %v493 = vshrl.u32 %v492, 7
    %v494 = vsub.s32 %v491, %v493
    %v495 = vrot.slane %v487, %v494
    %v497 = vunpack.c.l.s4 1966171168
    %v498 = vunpack.c.0.s8 %v497
    %v499 = vlaneseq
    %v500 = vshrl.u32 %v499, 7
    %v501 = vsub.s32 %v498, %v500
    %v502 = vrot.slane %v495, %v501
    %503 = vrot.lane.b32.xlu0 %v502, 96
    %v504 = vpop.permute.xlu0 %503
    %v506 = vadd.f32 %v477, %v504
    %507 = vst.msk [vmem:[#allocation7] sm:$0x1] %vm475, %v506
    %v508 = vld [vmem:[#allocation9] sm:$0x1]
    %v509 = vmul.f32 %v135, %v135
    %v510 = vmul.f32 %v140, %v140
    %v511 = vsel %vm241, %v509, 0.0
    %512 = vadd.xlane.f32.xlu0 %v511
    %v513 = vpop.xlane.xlu0 %512
    %v514 = vsel %vm241, %v510, 0.0
    %515 = vadd.xlane.f32.xlu0 %v514
    %v516 = vpop.xlane.xlu0 %515
    %v517 = vadd.f32 %v513, %v516
    %v518 = vrot.slane %v517, 4
    %v519 = vadd.f32 %v517, %v518
    %v520 = vrot.slane %v519, 2
    %v521 = vadd.f32 %v519, %v520
    %v522 = vrot.slane %v521, 1
    %v523 = vadd.f32 %v521, %v522
    %v524 = vadd.f32 %v508, %v523
    %vm525 = vcmask 0
    %526 = vst.msk [vmem:[#allocation9] sm:$0x1] %vm525, %v524
    %v527 = vld [vmem:[#allocation10] sm:$0x1]
    %v528 = vmul.f32 %v226, %v226
    %v529 = vmul.f32 %v231, %v231
    %v530 = vsel %vm241, %v528, 0.0
    %531 = vadd.xlane.f32.xlu0 %v530
    %v532 = vpop.xlane.xlu0 %531
    %v533 = vsel %vm241, %v529, 0.0
    %534 = vadd.xlane.f32.xlu0 %v533
    %v535 = vpop.xlane.xlu0 %534
    %v536 = vadd.f32 %v532, %v535
    %v537 = vrot.slane %v536, 4
    %v538 = vadd.f32 %v536, %v537
    %v539 = vrot.slane %v538, 2
    %v540 = vadd.f32 %v538, %v539
    %v541 = vrot.slane %v540, 1
    %v542 = vadd.f32 %v540, %v541
    %v543 = vadd.f32 %v527, %v542
    %544 = vst.msk [vmem:[#allocation10] sm:$0x1] %vm525, %v543
    // Predicated region
    $region34: #{tpu_custom_call.1} parent=1 // pred_check
      _
    $region35: #{tpu_custom_call.1} parent=1 // pred_check_branch
      %546 = sbr.rel (0) target = $region37
    $region36: #{tpu_custom_call.1} parent=1 // pred_region
      %s548 = ssub.s32 128, 128
      %549 = vsyncadd [#allocation3], %s548
      %s551 = sshll.u32 [#allocation2], 4
      %s552 = int_to_ptr.vmem [resolvable:$true] %s551
      %554 = dma.vmem_to_hbm [thread:$0]  %s552, 128, %s7, [#allocation3]
    $region37: #{tpu_custom_call.1} parent=1 // pred_fallthru
      _
    // Predicated region
    $region38: #{tpu_custom_call.1} parent=1 // pred_check
      _
    $region39: #{tpu_custom_call.1} parent=1 // pred_check_branch
      %556 = sbr.rel (0) target = $region41
    $region40: #{tpu_custom_call.1} parent=1 // pred_region
      %s558 = ssub.s32 512, 512
      %559 = vsyncadd [#allocation5], %s558
      %s560 = sshll.u32 [#allocation4], 4
      %s561 = int_to_ptr.vmem [resolvable:$true] %s560
      %566 = dma.vmem_to_hbm [thread:$0]  %s561, 512, %s8, [#allocation5], 128, 128, 8
    $region41: #{tpu_custom_call.1} parent=1 // pred_fallthru
      _
    // Predicated region
    $region42: #{tpu_custom_call.1} parent=1 // pred_check
      _
    $region43: #{tpu_custom_call.1} parent=1 // pred_check_branch
      %568 = sbr.rel (0) target = $region45
    $region44: #{tpu_custom_call.1} parent=1 // pred_region
      %s570 = ssub.s32 16, 16
      %571 = vsyncadd [#allocation5], %s570
      %s573 = sshll.u32 [#allocation6], 4
      %s574 = int_to_ptr.vmem [resolvable:$true] %s573
      %576 = dma.vmem_to_hbm [thread:$0]  %s574, 16, %s9, [#allocation5]
    $region45: #{tpu_custom_call.1} parent=1 // pred_fallthru
      _
    // Predicated region
    $region46: #{tpu_custom_call.1} parent=1 // pred_check
      _
    $region47: #{tpu_custom_call.1} parent=1 // pred_check_branch
      %578 = sbr.rel (0) target = $region49
    $region48: #{tpu_custom_call.1} parent=1 // pred_region
      %s580 = ssub.s32 16, 16
      %581 = vsyncadd [#allocation8], %s580
      %s583 = sshll.u32 [#allocation7], 4
      %s584 = int_to_ptr.vmem [resolvable:$true] %s583
      %586 = dma.vmem_to_hbm [thread:$0]  %s584, 16, %s10, [#allocation8]
    $region49: #{tpu_custom_call.1} parent=1 // pred_fallthru
      _
    // Predicated region
    $region50: #{tpu_custom_call.1} parent=1 // pred_check
      _
    $region51: #{tpu_custom_call.1} parent=1 // pred_check_branch
      %588 = sbr.rel (0) target = $region53
    $region52: #{tpu_custom_call.1} parent=1 // pred_region
      %s590 = ssub.s32 16, 16
      %591 = vsyncadd [#allocation8], %s590
      %s593 = sshll.u32 [#allocation9], 4
      %s594 = int_to_ptr.vmem [resolvable:$true] %s593
      %596 = dma.vmem_to_hbm [thread:$0]  %s594, 16, %s11, [#allocation8]
    $region53: #{tpu_custom_call.1} parent=1 // pred_fallthru
      _
    // Predicated region
    $region54: #{tpu_custom_call.1} parent=1 // pred_check
      _
    $region55: #{tpu_custom_call.1} parent=1 // pred_check_branch
      %598 = sbr.rel (0) target = $region57
    $region56: #{tpu_custom_call.1} parent=1 // pred_region
      %s600 = ssub.s32 16, 16
      %601 = vsyncadd [#allocation11], %s600
      %s603 = sshll.u32 [#allocation10], 4
      %s604 = int_to_ptr.vmem [resolvable:$true] %s603
      %606 = dma.vmem_to_hbm [thread:$0]  %s604, 16, %s12, [#allocation11]
    $region57: #{tpu_custom_call.1} parent=1 // pred_fallthru
      _
    // Predicated region
    $region58: #{tpu_custom_call.1} parent=1 // pred_check
      _
    $region59: #{tpu_custom_call.1} parent=1 // pred_check_branch
      %608 = sbr.rel (0) target = $region61
    $region60: #{tpu_custom_call.1} parent=1 // pred_region
      %609 = dma.done [#allocation3], 128
    $region61: #{tpu_custom_call.1} parent=1 // pred_fallthru
      _
    // Predicated region
    $region62: #{tpu_custom_call.1} parent=1 // pred_check
      _
    $region63: #{tpu_custom_call.1} parent=1 // pred_check_branch
      %611 = sbr.rel (0) target = $region65
    $region64: #{tpu_custom_call.1} parent=1 // pred_region
      %612 = dma.done [#allocation5], 512
    $region65: #{tpu_custom_call.1} parent=1 // pred_fallthru
      _
    // Predicated region
    $region66: #{tpu_custom_call.1} parent=1 // pred_check
      _
    $region67: #{tpu_custom_call.1} parent=1 // pred_check_branch
      %614 = sbr.rel (0) target = $region69
    $region68: #{tpu_custom_call.1} parent=1 // pred_region
      %615 = dma.done [#allocation5], 16
    $region69: #{tpu_custom_call.1} parent=1 // pred_fallthru
      _
    // Predicated region
    $region70: #{tpu_custom_call.1} parent=1 // pred_check
      _
    $region71: #{tpu_custom_call.1} parent=1 // pred_check_branch
      %617 = sbr.rel (0) target = $region73
    $region72: #{tpu_custom_call.1} parent=1 // pred_region
      %618 = dma.done [#allocation8], 16
    $region73: #{tpu_custom_call.1} parent=1 // pred_fallthru
      _
    // Predicated region
    $region74: #{tpu_custom_call.1} parent=1 // pred_check
      _
    $region75: #{tpu_custom_call.1} parent=1 // pred_check_branch
      %620 = sbr.rel (0) target = $region77
    $region76: #{tpu_custom_call.1} parent=1 // pred_region
      %621 = dma.done [#allocation8], 16
    $region77: #{tpu_custom_call.1} parent=1 // pred_fallthru
      _
    // Predicated region
    $region78: #{tpu_custom_call.1} parent=1 // pred_check
      _
    $region79: #{tpu_custom_call.1} parent=1 // pred_check_branch
      %623 = sbr.rel (0) target = $region81
    $region80: #{tpu_custom_call.1} parent=1 // pred_region
      %624 = dma.done [#allocation11], 16
    $region81: #{tpu_custom_call.1} parent=1 // pred_fallthru
      _
    %625 = vsyncpa [#allocation3], 1
    %626 = vsyncpa [#allocation5], 1
    %627 = vsyncpa [#allocation8], 1
    %628 = vsyncpa [#allocation11], 1

</llo_original>
